<compile_context>
chip_gen: v5e
topology: v5e:2x2
jax: 0.10.0
libtpu: 0.0.40
codegen_flags: <defaults>
</compile_context>

<pallas_src>
import functools

import jax
import jax.numpy as jnp
from jax.experimental import pallas as pl
from jax.experimental.pallas import tpu as pltpu


def _round_up(n, m):
    return (n + m - 1) // m * m


def _mish(x, approx_recip):
    # mish(x) = x * tanh(softplus(x)) = x * (e^{2x} + 2 e^x) / (e^{2x} + 2 e^x + 2)
    # Single EUP exp + one reciprocal instead of exp + log1p + tanh.
    xs = jnp.minimum(x, 20.0)          # e^{2*20} ~ 2.4e17 -- safe in f32
    e = jnp.exp(xs)
    num = e * e + 2.0 * e
    den = num + 2.0
    r = pl.reciprocal(den, approx=approx_recip)
    # mish(x) -> x for large x; also discards the clamped branch above 20.
    return jnp.where(x > 20.0, x, x * num * r)


def _ffn_kernel(x_ref, w1_ref, b1_ref, w2_ref, b2_ref, o_ref,
                *, matmul_dtype, approx_recip):
    # x_ref:  (d_in, TM)   current token tile (channel-first, f32)
    # w1_ref: (d_hid, d_in)    b1_ref: (d_hid, 1)
    # w2_ref: (d_in, d_hid)    b2_ref: (d_in, 1)
    x = x_ref[...]                                                  # f32 residual
    xm = x if matmul_dtype is None else x.astype(matmul_dtype)

    # w_1 (1x1 conv), channel-first: (d_hid, d_in) @ (d_in, TM) -> (d_hid, TM)
    h = jnp.dot(w1_ref[...], xm, preferred_element_type=jnp.float32)
    h = h + b1_ref[...]                                             # bias in f32
    h = _mish(h, approx_recip)           # mish after w_1 (dropout = identity)
    h = _mish(h, approx_recip)           # second mish before w_2

    hm = h if matmul_dtype is None else h.astype(matmul_dtype)
    # w_2 (1x1 conv): (d_in, d_hid) @ (d_hid, TM) -> (d_in, TM)
    y = jnp.dot(w2_ref[...], hm, preferred_element_type=jnp.float32)
    y = y + b2_ref[...]
    o_ref[...] = (y + x).astype(o_ref.dtype)                        # + residual (f32)


def sc_positionwise_ffn_high(x, w1, b1, w2, b2,
                             d_w=None, d_g=None, d_b=None,
                             p_w=None, p_g=None, p_b=None,
                             *, block_tokens=512,
                             matmul_dtype=jnp.bfloat16,
                             approx_recip=False,
                             vmem_limit_bytes=48 * 1024 * 1024):
    """x: (B, T, d_in) float32.  w1: (d_hid1, d_in), b1: (d_hid1,),
    w2: (d_in, d_hid2), b2: (d_in,)  (Conv1d kernel_size=1 weights, squeezed).

    d_*/p_* mirror the PyTorch forward signature; they feed a dead branch in the
    reference forward and are ignored here.

    matmul_dtype: dtype of the MXU operands (None -> keep f32 end to end).
    approx_recip: use the approximate EUP reciprocal inside mish (fast knob).
    """
    B, T, d_in = x.shape
    d_hid = w1.shape[0]
    assert w2.shape == (d_in, d_hid), "forward requires d_hid1 == d_hid2"

    x = jnp.asarray(x, jnp.float32)
    n_tok = B * T

    # Channel-first layout: tokens on the lane (last) axis -> lane-dense
    # activations, mish and output stores even for small d_in.
    xt = x.reshape(n_tok, d_in).T                                   # (d_in, n_tok)

    # Token tile: multiple of 128 lanes, shrunk until the per-step working set
    # (double-buffered x & out tiles + h/y intermediates) stays far below the
    # v7x 64 MiB VMEM (and the explicit vmem limit below).
    tm = max(128, min(_round_up(block_tokens, 128), _round_up(n_tok, 128)))
    bytes_per_token = 4 * (2 * 2 * d_in + 4 * d_hid)  # rough upper bound per lane column
    while tm > 128 and tm * bytes_per_token > 24 * 1024 * 1024:
        tm = _round_up(tm // 2, 128)

    n_pad = _round_up(n_tok, tm)
    if n_pad != n_tok:
        xt = jnp.pad(xt, ((0, 0), (0, n_pad - n_tok)))

    w1m = jnp.asarray(w1, jnp.float32)
    w2m = jnp.asarray(w2, jnp.float32)
    if matmul_dtype is not None:
        # Weights are only ever dot operands -> cast once in the wrapper
        # (halves their HBM/VMEM footprint). Bias/mish/residual stay f32.
        w1m = w1m.astype(matmul_dtype)
        w2m = w2m.astype(matmul_dtype)
    b1c = jnp.asarray(b1, jnp.float32).reshape(d_hid, 1)
    b2c = jnp.asarray(b2, jnp.float32).reshape(d_in, 1)

    kernel = functools.partial(_ffn_kernel,
                               matmul_dtype=matmul_dtype,
                               approx_recip=approx_recip)

    out = pl.pallas_call(
        kernel,
        out_shape=jax.ShapeDtypeStruct((d_in, n_pad), x.dtype),
        grid_spec=pltpu.PrefetchScalarGridSpec(
            num_scalar_prefetch=0,
            grid=(n_pad // tm,),
            in_specs=[
                pl.BlockSpec((d_in, tm), lambda i: (0, i)),       # activation tile
                pl.BlockSpec((d_hid, d_in), lambda i: (0, 0)),    # W1 (constant block)
                pl.BlockSpec((d_hid, 1), lambda i: (0, 0)),       # b1
                pl.BlockSpec((d_in, d_hid), lambda i: (0, 0)),    # W2 (constant block)
                pl.BlockSpec((d_in, 1), lambda i: (0, 0)),        # b2
            ],
            out_specs=pl.BlockSpec((d_in, tm), lambda i: (0, i)),
        ),
        compiler_params=pltpu.CompilerParams(
            dimension_semantics=("parallel",),
            vmem_limit_bytes=vmem_limit_bytes,
        ),
    )(xt, w1m, b1c, w2m, b2c)

    # drop token padding, back to (B, T, d_in)
    return out[:, :n_tok].T.reshape(B, T, d_in)


# ----------------------------- pure-JAX reference -----------------------------

def _mish_ref(x):
    return x * jnp.tanh(jax.nn.softplus(x))


def _reference(x, w1, b1, w2, b2, dot_dtype=None):
    def cast(a):
        return a if dot_dtype is None else a.astype(dot_dtype)
    h = jnp.einsum('btd,hd->bth', cast(x), cast(w1),
                   preferred_element_type=jnp.float32) + b1         # w_1 (1x1 conv)
    h = _mish_ref(h)
    h = _mish_ref(h)
    y = jnp.einsum('bth,dh->btd', cast(h), cast(w2),
                   preferred_element_type=jnp.float32) + b2         # w_2 (1x1 conv)
    return y + x


if __name__ == "__main__":
    # small shapes consistent with the module
    B, T = 2, 16
    d_in, d_hid1, d_hid2 = 8, 32, 32
    ker = 9

    key = jax.random.PRNGKey(0)
    ks = jax.random.split(key, 12)

    x = jax.random.normal(ks[0], (B, T, d_in), dtype=jnp.float32)

    # deterministic parameter init (Xavier-like) for the 1x1 ConvNorm layers
    w1 = jax.random.normal(ks[1], (d_hid1, d_in), dtype=jnp.float32) * (1.0 / jnp.sqrt(d_in))
    b1 = jax.random.normal(ks[2], (d_hid1,), dtype=jnp.float32) * 0.01
    w2 = jax.random.normal(ks[3], (d_in, d_hid2), dtype=jnp.float32) * (1.0 / jnp.sqrt(d_hid2))
    b2 = jax.random.normal(ks[4], (d_in,), dtype=jnp.float32) * 0.01

    # speaker-conditioned weights (dead branch in the reference forward; unused)
    in_ch = d_hid1
    d_w = jax.random.normal(ks[5], (B, in_ch, 1, ker), dtype=jnp.float32)
    d_g = jax.random.normal(ks[6], (B, in_ch), dtype=jnp.float32)
    d_b = jax.random.normal(ks[7], (B, in_ch), dtype=jnp.float32)
    p_w = jax.random.normal(ks[8], (B, in_ch, in_ch, 1), dtype=jnp.float32)
    p_g = jax.random.normal(ks[9], (B, in_ch), dtype=jnp.float32)
    p_b = jax.random.normal(ks[10], (B, in_ch), dtype=jnp.float32)

    ref_f32 = _reference(x, w1, b1, w2, b2)

    # 1) exact-semantics path: f32 MXU operands, exact reciprocal in mish
    out_f32 = sc_positionwise_ffn_high(x, w1, b1, w2, b2,
                                       d_w, d_g, d_b, p_w, p_g, p_b,
                                       matmul_dtype=None, approx_recip=False)
    out_f32 = jax.block_until_ready(out_f32)
    assert out_f32.shape == (B, T, d_in)
    assert jnp.allclose(out_f32, ref_f32, atol=1e-4, rtol=1e-4), "f32 mismatch vs reference"

    # 2) fast path: bf16 MXU operands (f32 accumulation / bias / mish / residual);
    #    compared against a reference that casts the same dot operands to bf16.
    out_bf16 = sc_positionwise_ffn_high(x, w1, b1, w2, b2,
                                        d_w, d_g, d_b, p_w, p_g, p_b,
                                        matmul_dtype=jnp.bfloat16, approx_recip=False)
    out_bf16 = jax.block_until_ready(out_bf16)
    ref_bf16 = _reference(x, w1, b1, w2, b2, dot_dtype=jnp.bfloat16)
    assert jnp.allclose(out_bf16, ref_bf16, atol=1e-3, rtol=1e-3), "bf16 mismatch vs bf16 reference"

    # 3) max-EUP-savings knob: approximate reciprocal inside mish (sanity check only)
    out_fast = sc_positionwise_ffn_high(x, w1, b1, w2, b2,
                                        d_w, d_g, d_b, p_w, p_g, p_b,
                                        matmul_dtype=jnp.bfloat16, approx_recip=True)
    out_fast = jax.block_until_ready(out_fast)
    assert out_fast.shape == (B, T, d_in)
    assert bool(jnp.all(jnp.isfinite(out_fast)))

    print("KERNEL_OK")
</pallas_src>

<mosaic_0001>
module attributes {stable_mosaic.version = 11 : i64} {
  func.func @_ffn_kernel(%arg0: i32, %arg1: memref<8x128xf32, #tpu.memory_space<vmem>>, %arg2: memref<32x8xf32, #tpu.memory_space<vmem>>, %arg3: memref<32x1xf32, #tpu.memory_space<vmem>>, %arg4: memref<8x32xf32, #tpu.memory_space<vmem>>, %arg5: memref<8x1xf32, #tpu.memory_space<vmem>>, %arg6: memref<8x128xf32, #tpu.memory_space<vmem>>) attributes {dimension_semantics = [#tpu.dimension_semantics<parallel>], iteration_bounds = array<i64: 1>, scalar_prefetch = 0 : i64, scratch_operands = 0 : i64, tpu.core_type = #tpu.core_type<tc>, window_params = [{transform_indices = @transform_0, window_bounds = array<i64: 8, 128>}, {pipeline_mode = #tpu.pipeline_mode<synchronous>, transform_indices = @transform_1, window_bounds = array<i64: 32, 8>}, {pipeline_mode = #tpu.pipeline_mode<synchronous>, transform_indices = @transform_2, window_bounds = array<i64: 32, 1>}, {pipeline_mode = #tpu.pipeline_mode<synchronous>, transform_indices = @transform_3, window_bounds = array<i64: 8, 32>}, {pipeline_mode = #tpu.pipeline_mode<synchronous>, transform_indices = @transform_4, window_bounds = array<i64: 8, 1>}, {transform_indices = @transform_5, window_bounds = array<i64: 8, 128>}]} {
    %c0 = arith.constant 0 : index
    %c0_0 = arith.constant 0 : index
    %0 = vector.load %arg1[%c0, %c0_0] : memref<8x128xf32, #tpu.memory_space<vmem>>, vector<8x128xf32>
    %c0_1 = arith.constant 0 : index
    %c0_2 = arith.constant 0 : index
    %1 = vector.load %arg2[%c0_1, %c0_2] : memref<32x8xf32, #tpu.memory_space<vmem>>, vector<32x8xf32>
    %cst = arith.constant dense<0.000000e+00> : vector<32x128xf32>
    %2 = tpu.matmul %1, %0, %cst {dimension_numbers = #tpu.dot_dimension_numbers<[1], [0], [0], [1], [0, 0, 1, 1], [], []>} : vector<32x8xf32>, vector<8x128xf32>, vector<32x128xf32> -> vector<32x128xf32>
    %c0_3 = arith.constant 0 : index
    %c0_4 = arith.constant 0 : index
    %3 = vector.load %arg3[%c0_3, %c0_4] : memref<32x1xf32, #tpu.memory_space<vmem>>, vector<32x1xf32>
    %4 = vector.broadcast %3 : vector<32x1xf32> to vector<32x128xf32>
    %5 = arith.addf %2, %4 : vector<32x128xf32>
    %cst_5 = arith.constant 2.000000e+01 : f32
    %6 = vector.broadcast %cst_5 : f32 to vector<32x128xf32>
    %7 = arith.minimumf %5, %6 : vector<32x128xf32>
    %8 = math.exp %7 : vector<32x128xf32>
    %9 = arith.mulf %8, %8 : vector<32x128xf32>
    %cst_6 = arith.constant 2.000000e+00 : f32
    %10 = vector.broadcast %cst_6 : f32 to vector<32x128xf32>
    %11 = arith.mulf %10, %8 : vector<32x128xf32>
    %12 = arith.addf %9, %11 : vector<32x128xf32>
    %cst_7 = arith.constant 2.000000e+00 : f32
    %13 = vector.broadcast %cst_7 : f32 to vector<32x128xf32>
    %14 = arith.addf %12, %13 : vector<32x128xf32>
    %15 = tpu.reciprocal %14 : vector<32x128xf32> -> vector<32x128xf32>
    %cst_8 = arith.constant 2.000000e+01 : f32
    %16 = vector.broadcast %cst_8 : f32 to vector<32x128xf32>
    %17 = arith.cmpf ogt, %5, %16 : vector<32x128xf32>
    %18 = arith.mulf %5, %12 : vector<32x128xf32>
    %19 = arith.mulf %18, %15 : vector<32x128xf32>
    %20 = arith.select %17, %5, %19 : vector<32x128xi1>, vector<32x128xf32>
    %cst_9 = arith.constant 2.000000e+01 : f32
    %21 = vector.broadcast %cst_9 : f32 to vector<32x128xf32>
    %22 = arith.minimumf %20, %21 : vector<32x128xf32>
    %23 = math.exp %22 : vector<32x128xf32>
    %24 = arith.mulf %23, %23 : vector<32x128xf32>
    %cst_10 = arith.constant 2.000000e+00 : f32
    %25 = vector.broadcast %cst_10 : f32 to vector<32x128xf32>
    %26 = arith.mulf %25, %23 : vector<32x128xf32>
    %27 = arith.addf %24, %26 : vector<32x128xf32>
    %cst_11 = arith.constant 2.000000e+00 : f32
    %28 = vector.broadcast %cst_11 : f32 to vector<32x128xf32>
    %29 = arith.addf %27, %28 : vector<32x128xf32>
    %30 = tpu.reciprocal %29 : vector<32x128xf32> -> vector<32x128xf32>
    %cst_12 = arith.constant 2.000000e+01 : f32
    %31 = vector.broadcast %cst_12 : f32 to vector<32x128xf32>
    %32 = arith.cmpf ogt, %20, %31 : vector<32x128xf32>
    %33 = arith.mulf %20, %27 : vector<32x128xf32>
    %34 = arith.mulf %33, %30 : vector<32x128xf32>
    %35 = arith.select %32, %20, %34 : vector<32x128xi1>, vector<32x128xf32>
    %c0_13 = arith.constant 0 : index
    %c0_14 = arith.constant 0 : index
    %36 = vector.load %arg4[%c0_13, %c0_14] : memref<8x32xf32, #tpu.memory_space<vmem>>, vector<8x32xf32>
    %cst_15 = arith.constant dense<0.000000e+00> : vector<8x128xf32>
    %37 = tpu.matmul %36, %35, %cst_15 {dimension_numbers = #tpu.dot_dimension_numbers<[1], [0], [0], [1], [0, 0, 1, 1], [], []>} : vector<8x32xf32>, vector<32x128xf32>, vector<8x128xf32> -> vector<8x128xf32>
    %c0_16 = arith.constant 0 : index
    %c0_17 = arith.constant 0 : index
    %38 = vector.load %arg5[%c0_16, %c0_17] : memref<8x1xf32, #tpu.memory_space<vmem>>, vector<8x1xf32>
    %39 = vector.broadcast %38 : vector<8x1xf32> to vector<8x128xf32>
    %40 = arith.addf %37, %39 : vector<8x128xf32>
    %41 = arith.addf %40, %0 : vector<8x128xf32>
    %c0_18 = arith.constant 0 : index
    %c0_19 = arith.constant 0 : index
    %42 = vector.load %arg6[%c0_18, %c0_19] : memref<8x128xf32, #tpu.memory_space<vmem>>, vector<8x128xf32>
    tpu.vector_store %arg6[%c0_18, %c0_19], %41 {strides = array<i32>} : memref<8x128xf32, #tpu.memory_space<vmem>>, vector<8x128xf32>,
    return
  }
  func.func @transform_0(%arg0: i32) -> (i32, i32) {
    %c0_i32 = arith.constant 0 : i32
    %c0_i32_0 = arith.constant 0 : i32
    return %c0_i32, %arg0 : i32, i32
  }
  func.func @transform_1(%arg0: i32) -> (i32, i32) {
    %c0_i32 = arith.constant 0 : i32
    %c0_i32_0 = arith.constant 0 : i32
    %c0_i32_1 = arith.constant 0 : i32
    return %c0_i32, %c0_i32_0 : i32, i32
  }
  func.func @transform_2(%arg0: i32) -> (i32, i32) {
    %c0_i32 = arith.constant 0 : i32
    %c0_i32_0 = arith.constant 0 : i32
    %c0_i32_1 = arith.constant 0 : i32
    return %c0_i32, %c0_i32_0 : i32, i32
  }
  func.func @transform_3(%arg0: i32) -> (i32, i32) {
    %c0_i32 = arith.constant 0 : i32
    %c0_i32_0 = arith.constant 0 : i32
    %c0_i32_1 = arith.constant 0 : i32
    return %c0_i32, %c0_i32_0 : i32, i32
  }
  func.func @transform_4(%arg0: i32) -> (i32, i32) {
    %c0_i32 = arith.constant 0 : i32
    %c0_i32_0 = arith.constant 0 : i32
    %c0_i32_1 = arith.constant 0 : i32
    return %c0_i32, %c0_i32_0 : i32, i32
  }
  func.func @transform_5(%arg0: i32) -> (i32, i32) {
    %c0_i32 = arith.constant 0 : i32
    %c0_i32_0 = arith.constant 0 : i32
    return %c0_i32, %arg0 : i32, i32
  }
}

</mosaic_0001>

<llo_original>
// kernel: tpu_custom_call.1
$region0: #{tpu_custom_call.1}
  #allocation0 [shape = 'u32[]', space=smem, size = 0x4, offset = 0x4, fixed_abs, tag = 'smem constant byte address 0x4 - core index']
  #allocation1 [shape = 'u32[72,128]{1,0:T(1,128)}', space=vmem, size = 0x9000, scoped, tag = 'internal scratch']
  %s0 = inlined_call_operand.vmem [shape: f32[8,128], index: 0, kind: input, shape index: {}]
  %s1 = inlined_call_operand.vmem [shape: f32[32,8], index: 1, kind: input, shape index: {}]
  %s2 = inlined_call_operand.vmem [shape: f32[32,1], index: 2, kind: input, shape index: {}]
  %s3 = inlined_call_operand.vmem [shape: f32[8,32], index: 3, kind: input, shape index: {}]
  %s4 = inlined_call_operand.vmem [shape: f32[8,1], index: 4, kind: input, shape index: {}]
  %s5 = inlined_call_operand.hbm [shape: f32[8,128], index: 5, kind: output, shape index: {}]
  %s6 = sld [smem:[#allocation0]]
  $region30: #{tpu_custom_call.1} parent=0
    _
  %s8 = ssub.s32 1, %s6
  %s9 = scalar_select 0, %s8, %s6
  $region1: #{tpu_custom_call.1} parent=0
    #allocation2 [shape = 'u8[4096]{0}', space=vmem, size = 0x1000, scoped, tag = 'output window, operand 0, single buffered']
    #allocation3 [shape = 's32[1]{0}', space=sflag, size = 0x4, scoped, tag = 'scoped memory for tpu_custom_call.1']
    %10 = vsyncpa [#allocation3], 0
    // Predicated region
    $region2: #{tpu_custom_call.1} parent=1 // pred_check
      _
    $region3: #{tpu_custom_call.1} parent=1 // pred_check_branch
      %12 = sbr.rel (0) target = $region5
    $region4: #{tpu_custom_call.1} parent=1 // pred_region
      _
    $region5: #{tpu_custom_call.1} parent=1 // pred_fallthru
      _
    // Predicated region
    $region6: #{tpu_custom_call.1} parent=1 // pred_check
      _
    $region7: #{tpu_custom_call.1} parent=1 // pred_check_branch
      %14 = sbr.rel (0) target = $region9
    $region8: #{tpu_custom_call.1} parent=1 // pred_region
      _
    $region9: #{tpu_custom_call.1} parent=1 // pred_fallthru
      _
    // Predicated region
    $region10: #{tpu_custom_call.1} parent=1 // pred_check
      _
    $region11: #{tpu_custom_call.1} parent=1 // pred_check_branch
      %16 = sbr.rel (0) target = $region13
    $region12: #{tpu_custom_call.1} parent=1 // pred_region
      _
    $region13: #{tpu_custom_call.1} parent=1 // pred_fallthru
      _
    // Predicated region
    $region14: #{tpu_custom_call.1} parent=1 // pred_check
      _
    $region15: #{tpu_custom_call.1} parent=1 // pred_check_branch
      %18 = sbr.rel (0) target = $region17
    $region16: #{tpu_custom_call.1} parent=1 // pred_region
      _
    $region17: #{tpu_custom_call.1} parent=1 // pred_fallthru
      _
    // Predicated region
    $region18: #{tpu_custom_call.1} parent=1 // pred_check
      _
    $region19: #{tpu_custom_call.1} parent=1 // pred_check_branch
      %20 = sbr.rel (0) target = $region21
    $region20: #{tpu_custom_call.1} parent=1 // pred_region
      _
    $region21: #{tpu_custom_call.1} parent=1 // pred_fallthru
      _
    %v21 = vld [vmem:[%s0] sm:$0xff]
    %v22 = vld [vmem:[%s1] sm:$0xff]
    %v23 = vld [vmem:[%s1 + $0x8] sm:$0xff]
    %v24 = vld [vmem:[%s1 + $0x10] sm:$0xff]
    %v25 = vld [vmem:[%s1 + $0x18] sm:$0xff]
    %v26 = vld [vmem:[%s2] sm:$0xff]
    %v27 = vld [vmem:[%s2 + $0x8] sm:$0xff]
    %v28 = vld [vmem:[%s2 + $0x10] sm:$0xff]
    %v29 = vld [vmem:[%s2 + $0x18] sm:$0xff]
    %31 = vset.pattern.permute.xlu0 0
    %32 = vperm.xlu0 %31, %v26
    %v33 = vpop.permute.xlu0 %32
    %36 = vset.pattern.permute.xlu0 0
    %37 = vperm.xlu0 %36, %v27
    %v38 = vpop.permute.xlu0 %37
    %41 = vset.pattern.permute.xlu0 0
    %42 = vperm.xlu0 %41, %v28
    %v43 = vpop.permute.xlu0 %42
    %46 = vset.pattern.permute.xlu0 0
    %47 = vperm.xlu0 %46, %v29
    %v48 = vpop.permute.xlu0 %47
    %vm50 = vcmask 64512
    %v52 = vsel %vm50, %v22, 0
    %v55 = vsel %vm50, %v23, 0
    %v58 = vsel %vm50, %v24, 0
    %v61 = vsel %vm50, %v25, 0
    %63 = vmatpush.msra.mxu0 0.0
    %64 = vmatpush.msra.mxu0 0.0
    %65 = vmatpush.msra.mxu0 0.0
    %66 = vmatpush.msra.mxu0 0.0
    %67 = vmatpush.msra.mxu0 0.0
    %68 = vmatpush.msra.mxu0 0.0
    %69 = vmatpush.msra.mxu0 0.0
    %70 = vmatpush.msra.mxu0 0.0
    %71 = vmatpush.msra.mxu0 0.0
    %72 = vmatpush.msra.mxu0 0.0
    %73 = vmatpush.msra.mxu0 0.0
    %74 = vmatpush.msra.mxu0 0.0
    %75 = vmatpush.msra.mxu0 0.0
    %76 = vmatpush.msra.mxu0 0.0
    %77 = vmatpush.msra.mxu0 0.0
    %78 = vmatpush.msra.mxu0 %v21
    %79 = vmatmul.f32.gmra.mxu0 %v52
    %v80 = vpop.f32.mrf.mxu0
    %v81 = vadd.f32 %v33, %v80
    %82 = vmatmul.f32.gmra.mxu0 %v55
    %v83 = vpop.f32.mrf.mxu0
    %v84 = vadd.f32 %v38, %v83
    %85 = vmatmul.f32.gmra.mxu0 %v58
    %v86 = vpop.f32.mrf.mxu0
    %v87 = vadd.f32 %v43, %v86
    %88 = vmatmul.f32.gmra.mxu0 %v61
    %v89 = vpop.f32.mrf.mxu0
    %v90 = vadd.f32 %v48, %v89
    %91 = vdwg.mxu0
    %v92 = vmin.f32 %v81, 20.0
    %v93 = vmin.f32 %v84, 20.0
    %v94 = vmin.f32 %v87, 20.0
    %v95 = vmin.f32 %v90, 20.0
    %v96 = vmul.f32 %v92, 1.442695
    %v97 = vpow.pop %v96
    %v98 = vmul.f32 %v93, 1.442695
    %v99 = vpow.pop %v98
    %v100 = vmul.f32 %v94, 1.442695
    %v101 = vpow.pop %v100
    %v102 = vmul.f32 %v95, 1.442695
    %v103 = vpow.pop %v102
    %v104 = vmul.f32 %v97, %v97
    %v105 = vmul.f32 %v99, %v99
    %v106 = vmul.f32 %v101, %v101
    %v107 = vmul.f32 %v103, %v103
    %v108 = vmul.f32 %v97, 2.0
    %v109 = vmul.f32 %v99, 2.0
    %v110 = vmul.f32 %v101, 2.0
    %v111 = vmul.f32 %v103, 2.0
    %v112 = vadd.f32 %v104, %v108
    %v113 = vadd.f32 %v105, %v109
    %v114 = vadd.f32 %v106, %v110
    %v115 = vadd.f32 %v107, %v111
    %v116 = vadd.f32 %v112, 2.0
    %v117 = vadd.f32 %v113, 2.0
    %v118 = vadd.f32 %v114, 2.0
    %v119 = vadd.f32 %v115, 2.0
    %v120 = vrcp.pop %v116
    %v121 = vmul.f32 %v116, %v120
    %v122 = vsub.f32 1.0, %v121
    %v123 = vmul.f32 %v120, %v122
    %v124 = vadd.f32 %v120, %v123
    %vm125 = vweird.f32 %v116
    %vm126 = vweird.f32 %v120
    %vm127 = vmor %vm125, %vm126
    %v128 = vsel %vm127, %v120, %v124
    %v129 = vand.u32 2147483647, %v116
    %vm130 = vcmp.eq.f32.partialorder %v129, 8.507059e+37
    %v131 = vand.u32 %v116, 2147483648
    %v132 = vor.u32 1.1754944e-38, %v131
    %v133 = vsel %vm130, %v132, %v128
    %v134 = vrcp.pop %v117
    %v135 = vmul.f32 %v117, %v134
    %v136 = vsub.f32 1.0, %v135
    %v137 = vmul.f32 %v134, %v136
    %v138 = vadd.f32 %v134, %v137
    %vm139 = vweird.f32 %v117
    %vm140 = vweird.f32 %v134
    %vm141 = vmor %vm139, %vm140
    %v142 = vsel %vm141, %v134, %v138
    %v143 = vand.u32 2147483647, %v117
    %vm144 = vcmp.eq.f32.partialorder %v143, 8.507059e+37
    %v145 = vand.u32 %v117, 2147483648
    %v146 = vor.u32 1.1754944e-38, %v145
    %v147 = vsel %vm144, %v146, %v142
    %v148 = vrcp.pop %v118
    %v149 = vmul.f32 %v118, %v148
    %v150 = vsub.f32 1.0, %v149
    %v151 = vmul.f32 %v148, %v150
    %v152 = vadd.f32 %v148, %v151
    %vm153 = vweird.f32 %v118
    %vm154 = vweird.f32 %v148
    %vm155 = vmor %vm153, %vm154
    %v156 = vsel %vm155, %v148, %v152
    %v157 = vand.u32 2147483647, %v118
    %vm158 = vcmp.eq.f32.partialorder %v157, 8.507059e+37
    %v159 = vand.u32 %v118, 2147483648
    %v160 = vor.u32 1.1754944e-38, %v159
    %v161 = vsel %vm158, %v160, %v156
    %v162 = vrcp.pop %v119
    %v163 = vmul.f32 %v119, %v162
    %v164 = vsub.f32 1.0, %v163
    %v165 = vmul.f32 %v162, %v164
    %v166 = vadd.f32 %v162, %v165
    %vm167 = vweird.f32 %v119
    %vm168 = vweird.f32 %v162
    %vm169 = vmor %vm167, %vm168
    %v170 = vsel %vm169, %v162, %v166
    %v171 = vand.u32 2147483647, %v119
    %vm172 = vcmp.eq.f32.partialorder %v171, 8.507059e+37
    %v173 = vand.u32 %v119, 2147483648
    %v174 = vor.u32 1.1754944e-38, %v173
    %v175 = vsel %vm172, %v174, %v170
    %vm176 = vcmp.gt.f32.partialorder %v81, 20.0
    %vm177 = vcmp.gt.f32.partialorder %v84, 20.0
    %vm178 = vcmp.gt.f32.partialorder %v87, 20.0
    %vm179 = vcmp.gt.f32.partialorder %v90, 20.0
    %v180 = vmul.f32 %v81, %v112
    %v181 = vmul.f32 %v84, %v113
    %v182 = vmul.f32 %v87, %v114
    %v183 = vmul.f32 %v90, %v115
    %v184 = vmul.f32 %v180, %v133
    %v185 = vmul.f32 %v181, %v147
    %v186 = vmul.f32 %v182, %v161
    %v187 = vmul.f32 %v183, %v175
    %v188 = vsel %vm176, %v81, %v184
    %v189 = vsel %vm177, %v84, %v185
    %v190 = vsel %vm178, %v87, %v186
    %v191 = vsel %vm179, %v90, %v187
    %v192 = vmin.f32 %v188, 20.0
    %v193 = vmin.f32 %v189, 20.0
    %v194 = vmin.f32 %v190, 20.0
    %v195 = vmin.f32 %v191, 20.0
    %v196 = vmul.f32 %v192, 1.442695
    %v197 = vpow.pop %v196
    %v198 = vmul.f32 %v193, 1.442695
    %v199 = vpow.pop %v198
    %v200 = vmul.f32 %v194, 1.442695
    %v201 = vpow.pop %v200
    %v202 = vmul.f32 %v195, 1.442695
    %v203 = vpow.pop %v202
    %v204 = vmul.f32 %v197, %v197
    %v205 = vmul.f32 %v199, %v199
    %v206 = vmul.f32 %v201, %v201
    %v207 = vmul.f32 %v203, %v203
    %v208 = vmul.f32 %v197, 2.0
    %v209 = vmul.f32 %v199, 2.0
    %v210 = vmul.f32 %v201, 2.0
    %v211 = vmul.f32 %v203, 2.0
    %v212 = vadd.f32 %v204, %v208
    %v213 = vadd.f32 %v205, %v209
    %v214 = vadd.f32 %v206, %v210
    %v215 = vadd.f32 %v207, %v211
    %v216 = vadd.f32 %v212, 2.0
    %v217 = vadd.f32 %v213, 2.0
    %v218 = vadd.f32 %v214, 2.0
    %v219 = vadd.f32 %v215, 2.0
    %v220 = vrcp.pop %v216
    %v221 = vmul.f32 %v216, %v220
    %v222 = vsub.f32 1.0, %v221
    %v223 = vmul.f32 %v220, %v222
    %v224 = vadd.f32 %v220, %v223
    %vm225 = vweird.f32 %v216
    %vm226 = vweird.f32 %v220
    %vm227 = vmor %vm225, %vm226
    %v228 = vsel %vm227, %v220, %v224
    %v229 = vand.u32 2147483647, %v216
    %vm230 = vcmp.eq.f32.partialorder %v229, 8.507059e+37
    %v231 = vand.u32 %v216, 2147483648
    %v232 = vor.u32 1.1754944e-38, %v231
    %v233 = vsel %vm230, %v232, %v228
    %v234 = vrcp.pop %v217
    %v235 = vmul.f32 %v217, %v234
    %v236 = vsub.f32 1.0, %v235
    %v237 = vmul.f32 %v234, %v236
    %v238 = vadd.f32 %v234, %v237
    %vm239 = vweird.f32 %v217
    %vm240 = vweird.f32 %v234
    %vm241 = vmor %vm239, %vm240
    %v242 = vsel %vm241, %v234, %v238
    %v243 = vand.u32 2147483647, %v217
    %vm244 = vcmp.eq.f32.partialorder %v243, 8.507059e+37
    %v245 = vand.u32 %v217, 2147483648
    %v246 = vor.u32 1.1754944e-38, %v245
    %v247 = vsel %vm244, %v246, %v242
    %v248 = vrcp.pop %v218
    %v249 = vmul.f32 %v218, %v248
    %v250 = vsub.f32 1.0, %v249
    %v251 = vmul.f32 %v248, %v250
    %v252 = vadd.f32 %v248, %v251
    %vm253 = vweird.f32 %v218
    %vm254 = vweird.f32 %v248
    %vm255 = vmor %vm253, %vm254
    %v256 = vsel %vm255, %v248, %v252
    %v257 = vand.u32 2147483647, %v218
    %vm258 = vcmp.eq.f32.partialorder %v257, 8.507059e+37
    %v259 = vand.u32 %v218, 2147483648
    %v260 = vor.u32 1.1754944e-38, %v259
    %v261 = vsel %vm258, %v260, %v256
    %v262 = vrcp.pop %v219
    %v263 = vmul.f32 %v219, %v262
    %v264 = vsub.f32 1.0, %v263
    %v265 = vmul.f32 %v262, %v264
    %v266 = vadd.f32 %v262, %v265
    %vm267 = vweird.f32 %v219
    %vm268 = vweird.f32 %v262
    %vm269 = vmor %vm267, %vm268
    %v270 = vsel %vm269, %v262, %v266
    %v271 = vand.u32 2147483647, %v219
    %vm272 = vcmp.eq.f32.partialorder %v271, 8.507059e+37
    %v273 = vand.u32 %v219, 2147483648
    %v274 = vor.u32 1.1754944e-38, %v273
    %v275 = vsel %vm272, %v274, %v270
    %vm276 = vcmp.gt.f32.partialorder %v188, 20.0
    %vm277 = vcmp.gt.f32.partialorder %v189, 20.0
    %vm278 = vcmp.gt.f32.partialorder %v190, 20.0
    %vm279 = vcmp.gt.f32.partialorder %v191, 20.0
    %v280 = vmul.f32 %v188, %v212
    %v281 = vmul.f32 %v189, %v213
    %v282 = vmul.f32 %v190, %v214
    %v283 = vmul.f32 %v191, %v215
    %v284 = vmul.f32 %v280, %v233
    %v285 = vmul.f32 %v281, %v247
    %v286 = vmul.f32 %v282, %v261
    %v287 = vmul.f32 %v283, %v275
    %v288 = vsel %vm276, %v188, %v284
    %v289 = vsel %vm277, %v189, %v285
    %v290 = vsel %vm278, %v190, %v286
    %v291 = vsel %vm279, %v191, %v287
    %v292 = vld [vmem:[%s3] sm:$0xff]
    %v293 = vld [vmem:[%s4] sm:$0xff]
    %295 = vset.pattern.permute.xlu0 0
    %296 = vperm.xlu0 %295, %v293
    %v297 = vpop.permute.xlu0 %296
    %vm299 = vcmask 261120
    %v301 = vsel %vm299, %v292, 0
    %303 = vmatpush.msra.mxu0 0.0
    %304 = vmatpush.msra.mxu0 0.0
    %305 = vmatpush.msra.mxu0 0.0
    %306 = vmatpush.msra.mxu0 0.0
    %307 = vmatpush.msra.mxu0 0.0
    %308 = vmatpush.msra.mxu0 0.0
    %309 = vmatpush.msra.mxu0 0.0
    %310 = vmatpush.msra.mxu0 0.0
    %311 = vmatpush.msra.mxu0 0.0
    %312 = vmatpush.msra.mxu0 0.0
    %313 = vmatpush.msra.mxu0 0.0
    %314 = vmatpush.msra.mxu0 0.0
    %315 = vmatpush.msra.mxu0 %v291
    %316 = vmatpush.msra.mxu0 %v290
    %317 = vmatpush.msra.mxu0 %v289
    %318 = vmatpush.msra.mxu0 %v288
    %319 = vmatmul.f32.gmra.mxu0 %v301
    %v320 = vpop.f32.mrf.mxu0
    %v321 = vadd.f32 %v297, %v320
    %322 = vdwg.mxu0
    %v323 = vadd.f32 %v321, %v21
    %324 = vst [vmem:[#allocation2] sm:$0xff] %v323
    // Predicated region
    $region22: #{tpu_custom_call.1} parent=1 // pred_check
      _
    $region23: #{tpu_custom_call.1} parent=1 // pred_check_branch
      %326 = sbr.rel (0) target = $region25
    $region24: #{tpu_custom_call.1} parent=1 // pred_region
      %328 = vsyncadd [#allocation3], 0
      %s330 = sshll.u32 [#allocation2], 4
      %s331 = int_to_ptr.vmem [resolvable:$true] %s330
      %s332 = sshll.u32 %s5, 4
      %s333 = int_to_ptr.hbm [resolvable:$true] %s332
      %335 = dma.vmem_to_hbm [thread:$0]  %s331, 128, %s333, [#allocation3]
    $region25: #{tpu_custom_call.1} parent=1 // pred_fallthru
      _
    // Predicated region
    $region26: #{tpu_custom_call.1} parent=1 // pred_check
      _
    $region27: #{tpu_custom_call.1} parent=1 // pred_check_branch
      %337 = sbr.rel (0) target = $region29
    $region28: #{tpu_custom_call.1} parent=1 // pred_region
      %339 = dma.done [#allocation3], 128
    $region29: #{tpu_custom_call.1} parent=1 // pred_fallthru
      _
    %340 = vsyncpa [#allocation3], 1

</llo_original>
